<compile_context>
chip_gen: v6e
topology: v6e:2x2x1
jax: 0.10.0
libtpu: 0.0.40
codegen_flags: <defaults>
</compile_context>

<pallas_src>
import functools

import jax
import jax.numpy as jnp
import numpy as np
from jax.experimental import pallas as pl
from jax.experimental.pallas import tpu as pltpu


# ----------------------------- kernels -------------------------------------


def _bn_train_kernel(x_ref, w_ref, b_ref, o_ref, mean_ref, var_ref, *, eps, inv_n):
    """One-pass batch stats over axis 1 (f32), fused scale/shift apply."""
    x = x_ref[...]                                             # (TT, N, CC)
    xf = x.astype(jnp.float32)
    mean = jnp.sum(xf, axis=1, keepdims=True) * inv_n          # (TT, 1, CC)
    ex2 = jnp.sum(xf * xf, axis=1, keepdims=True) * inv_n
    var = jnp.maximum(ex2 - mean * mean, 0.0)                  # biased (unbiased=False)
    inv = jax.lax.rsqrt(var + eps)
    w = w_ref[...][None, :, :]                                 # (1, 1, CC) f32, resident
    b = b_ref[...][None, :, :]
    scale = inv * w
    shift = b - mean * scale
    if x_ref.dtype == jnp.bfloat16:
        # bf16 apply path (v6e/v7x bf16 VALUs); stats above stay f32.
        y = x * scale.astype(jnp.bfloat16) + shift.astype(jnp.bfloat16)
    else:
        y = xf * scale + shift
    o_ref[...] = y.astype(o_ref.dtype)
    mean_ref[...] = mean[:, 0, :]
    var_ref[...] = var[:, 0, :]


def _bn_eval_kernel(x_ref, scale_ref, shift_ref, o_ref):
    """Pure per-element FMA with precomputed (running-stat) scale/shift."""
    x = x_ref[...]                                             # (TT, N, CC)
    scale = scale_ref[...][:, None, :]                         # (TT, 1, CC) f32
    shift = shift_ref[...][:, None, :]
    if x_ref.dtype == jnp.bfloat16:
        y = x * scale.astype(jnp.bfloat16) + shift.astype(jnp.bfloat16)
    else:
        y = x.astype(jnp.float32) * scale + shift
    o_ref[...] = y.astype(o_ref.dtype)


# ----------------------------- tiling helpers --------------------------------


def _choose_tiles(T, N, C, x_itemsize, *, vmem_budget_bytes=16 * 1024 * 1024,
                  min_grid_t=4):
    """Pick (time_tile, channel_tile).

    Per-element footprint counts double-buffered input + output blocks plus the
    f32 intermediates the kernel body materialises.  The time tile is capped so
    the grid keeps >= min_grid_t steps (pipelining + megacore sharding) and is
    kept a multiple of 8 for the (TT, CC) stats-output blocks.  If even one
    8-step block would overflow the budget, the channel axis is tiled in
    multiples of 128 instead.
    """
    per_elem = 4 * x_itemsize + 8          # 2x in + 2x out buffers + f32 temps
    CC = C
    if C % 128 == 0:
        while CC > 128 and 8 * N * CC * per_elem > vmem_budget_bytes:
            half = CC // 2
            if half % 128 == 0 and C % half == 0:
                CC = half
            else:
                break
    per_step = max(1, N * CC * per_elem)
    tt = max(1, vmem_budget_bytes // per_step)
    # never let the grid collapse below ~min_grid_t steps (pipelining / 2 TCs)
    tt = min(tt, max(1, pl.cdiv(T, min_grid_t)))
    if tt >= T:
        TT = T
    else:
        TT = min(T, max(8, (tt // 8) * 8))
    return TT, CC


def _vmem_limit_bytes(TT, N, CC, x_itemsize):
    blocks = 4 * TT * N * CC * x_itemsize          # double-buffered in + out blocks
    small = 4 * TT * CC * 4 + 4 * CC * 4           # stats / scale-shift + weight/bias
    temps = 3 * TT * N * CC * 4                    # in-kernel f32 intermediates
    need = blocks + small + temps
    # generous margin, but stay safely under v7x's 64 MiB physical VMEM
    return int(min(56 * 1024 * 1024, max(32 * 1024 * 1024, 2 * need)))


# ----------------------------- wrapper --------------------------------------


def my_batchnorm_step_forward(
    x,
    weight,
    bias,
    running_mean,
    running_var,
    num_batches_tracked,
    BN_start0,
    *,
    seq_len,
    eps=1e-5,
    momentum=0.1,
    affine=True,
    track_running_stats=True,
    training=True,
    time_tile=None,
):
    """Returns (output, new_running_mean, new_running_var, new_num_batches_tracked)."""
    T, N, C = x.shape
    max_time_step = seq_len * 2
    BN_start = jnp.minimum(jnp.asarray(BN_start0, jnp.int32),
                           jnp.int32(max_time_step))

    if affine and weight is not None:
        w2 = weight.astype(jnp.float32).reshape(1, C)
        b2 = bias.astype(jnp.float32).reshape(1, C)
    else:
        w2 = jnp.ones((1, C), jnp.float32)
        b2 = jnp.zeros((1, C), jnp.float32)

    itemsize = jnp.dtype(x.dtype).itemsize
    TT, CC = _choose_tiles(T, N, C, itemsize)
    if time_tile is not None:
        TT = int(time_tile)
        if TT != T and TT % 8 != 0:
            raise ValueError("time_tile must equal T or be a multiple of 8")
    grid = (pl.cdiv(T, TT), pl.cdiv(C, CC))
    cparams = pltpu.CompilerParams(
        dimension_semantics=("parallel", "parallel"),
        vmem_limit_bytes=_vmem_limit_bytes(TT, N, CC, itemsize),
    )

    if training:
        kernel = functools.partial(_bn_train_kernel, eps=eps, inv_n=1.0 / float(N))
        y, mean, var = pl.pallas_call(
            kernel,
            out_shape=(
                jax.ShapeDtypeStruct((T, N, C), x.dtype),
                jax.ShapeDtypeStruct((T, C), jnp.float32),
                jax.ShapeDtypeStruct((T, C), jnp.float32),
            ),
            grid=grid,
            in_specs=[
                pl.BlockSpec((TT, N, CC), lambda t, c: (t, 0, c)),
                pl.BlockSpec((1, CC), lambda t, c: (0, c)),     # resident weight tile
                pl.BlockSpec((1, CC), lambda t, c: (0, c)),     # resident bias tile
            ],
            out_specs=(
                pl.BlockSpec((TT, N, CC), lambda t, c: (t, 0, c)),
                pl.BlockSpec((TT, CC), lambda t, c: (t, c)),
                pl.BlockSpec((TT, CC), lambda t, c: (t, c)),
            ),
            compiler_params=cparams,
        )(x, w2, b2)

        new_rm, new_rv, new_nbt = running_mean, running_var, num_batches_tracked
        if track_running_stats and num_batches_tracked is not None:
            new_nbt = num_batches_tracked + 1
            if momentum is None:
                eaf = 1.0 / new_nbt.astype(jnp.float32)
            else:
                eaf = momentum
            n = float(N)
            zero = jnp.int32(0)
            # NOTE: dynamic_slice clamps the start index; caller must ensure
            # BN_start + T <= running_mean.shape[0] (same contract as PyTorch).
            old_m = jax.lax.dynamic_slice(running_mean, (BN_start, zero), (T, C))
            old_v = jax.lax.dynamic_slice(running_var, (BN_start, zero), (T, C))
            upd_m = eaf * mean + (1.0 - eaf) * old_m
            upd_v = eaf * var * (n / (n - 1.0)) + (1.0 - eaf) * old_v
            new_rm = jax.lax.dynamic_update_slice(
                running_mean, upd_m.astype(running_mean.dtype), (BN_start, zero))
            new_rv = jax.lax.dynamic_update_slice(
                running_var, upd_v.astype(running_var.dtype), (BN_start, zero))
        return y, new_rm, new_rv, new_nbt

    # eval: use running statistics, precompute scale/shift at (T, C) in the wrapper
    zero = jnp.int32(0)
    mean = jax.lax.dynamic_slice(running_mean, (BN_start, zero), (T, C)).astype(jnp.float32)
    var = jax.lax.dynamic_slice(running_var, (BN_start, zero), (T, C)).astype(jnp.float32)
    scale = w2 * jax.lax.rsqrt(var + eps)       # (T, C)
    shift = b2 - mean * scale
    y = pl.pallas_call(
        _bn_eval_kernel,
        out_shape=jax.ShapeDtypeStruct((T, N, C), x.dtype),
        grid=grid,
        in_specs=[
            pl.BlockSpec((TT, N, CC), lambda t, c: (t, 0, c)),
            pl.BlockSpec((TT, CC), lambda t, c: (t, c)),
            pl.BlockSpec((TT, CC), lambda t, c: (t, c)),
        ],
        out_specs=pl.BlockSpec((TT, N, CC), lambda t, c: (t, 0, c)),
        compiler_params=cparams,
    )(x, scale, shift)
    return y, running_mean, running_var, num_batches_tracked


# ----------------------------- demo / check ---------------------------------


if __name__ == "__main__":
    key = jax.random.PRNGKey(0)
    seq_len = 9
    hidden = 128            # channel dim, lane-dense (multiple of 128)
    batch = 8
    T = 32                  # time steps in this call (auto tiler -> TT=8, grid=(4,1))
    BN_start0 = 3
    eps = 1e-5
    momentum = 0.1
    time_d = seq_len * 4 + 1

    k1, k2, k3, k4, k5 = jax.random.split(key, 5)
    x = jax.random.normal(k1, (T, batch, hidden), dtype=jnp.float32)
    weight = 1.0 + 0.1 * jax.random.normal(k2, (hidden,), dtype=jnp.float32)
    bias = 0.1 * jax.random.normal(k3, (hidden,), dtype=jnp.float32)
    running_mean = 0.05 * jax.random.normal(k4, (time_d, hidden), dtype=jnp.float32)
    running_var = 1.0 + 0.1 * jnp.abs(jax.random.normal(k5, (time_d, hidden), dtype=jnp.float32))
    nbt = jnp.array(0, dtype=jnp.int32)

    # training-mode forward (auto time tile -> multi-step pipelined grid)
    y_tr, rm_tr, rv_tr, nbt_tr = my_batchnorm_step_forward(
        x, weight, bias, running_mean, running_var, nbt, BN_start0,
        seq_len=seq_len, eps=eps, momentum=momentum, training=True)
    y_tr = jax.block_until_ready(y_tr)

    # eval-mode forward
    y_ev, _, _, _ = my_batchnorm_step_forward(
        x, weight, bias, running_mean, running_var, nbt, BN_start0,
        seq_len=seq_len, eps=eps, momentum=momentum, training=False)
    y_ev = jax.block_until_ready(y_ev)

    # ---- numpy reference (mirrors the PyTorch forward) ----
    xn = np.asarray(x, np.float64)
    wn = np.asarray(weight, np.float64)
    bn = np.asarray(bias, np.float64)
    rmn = np.asarray(running_mean, np.float64)
    rvn = np.asarray(running_var, np.float64)
    BN_start = min(BN_start0, 2 * seq_len)

    mean_t = xn.mean(axis=1)
    var_t = xn.var(axis=1)                     # unbiased=False
    ref_tr = (xn - mean_t[:, None, :]) / np.sqrt(var_t[:, None, :] + eps)
    ref_tr = ref_tr * wn[None, None, :] + bn[None, None, :]

    n = batch
    ref_rm, ref_rv = rmn.copy(), rvn.copy()
    ref_rm[BN_start:BN_start + T] = momentum * mean_t + (1 - momentum) * rmn[BN_start:BN_start + T]
    ref_rv[BN_start:BN_start + T] = momentum * var_t * n / (n - 1) + (1 - momentum) * rvn[BN_start:BN_start + T]

    mean_e = rmn[BN_start:BN_start + T]
    var_e = rvn[BN_start:BN_start + T]
    ref_ev = (xn - mean_e[:, None, :]) / np.sqrt(var_e[:, None, :] + eps)
    ref_ev = ref_ev * wn[None, None, :] + bn[None, None, :]

    assert np.allclose(np.asarray(y_tr), ref_tr, rtol=2e-3, atol=2e-3)
    assert np.allclose(np.asarray(rm_tr), ref_rm, rtol=1e-4, atol=1e-5)
    assert np.allclose(np.asarray(rv_tr), ref_rv, rtol=1e-4, atol=1e-5)
    assert int(nbt_tr) == 1
    assert np.allclose(np.asarray(y_ev), ref_ev, rtol=2e-3, atol=2e-3)

    print("KERNEL_OK")
</pallas_src>

<mosaic_0001>
module attributes {stable_mosaic.version = 11 : i64} {
  func.func @_bn_train_kernel(%arg0: i32, %arg1: i32, %arg2: memref<8x8x128xf32, #tpu.memory_space<vmem>>, %arg3: memref<1x128xf32, #tpu.memory_space<vmem>>, %arg4: memref<1x128xf32, #tpu.memory_space<vmem>>, %arg5: memref<8x8x128xf32, #tpu.memory_space<vmem>>, %arg6: memref<8x128xf32, #tpu.memory_space<vmem>>, %arg7: memref<8x128xf32, #tpu.memory_space<vmem>>) attributes {dimension_semantics = [#tpu.dimension_semantics<parallel>, #tpu.dimension_semantics<parallel>], iteration_bounds = array<i64: 4, 1>, scalar_prefetch = 0 : i64, scratch_operands = 0 : i64, tpu.core_type = #tpu.core_type<tc>, window_params = [{transform_indices = @transform_0, window_bounds = array<i64: 8, 8, 128>}, {transform_indices = @transform_1, window_bounds = array<i64: 1, 128>}, {transform_indices = @transform_2, window_bounds = array<i64: 1, 128>}, {transform_indices = @transform_3, window_bounds = array<i64: 8, 8, 128>}, {transform_indices = @transform_4, window_bounds = array<i64: 8, 128>}, {transform_indices = @transform_5, window_bounds = array<i64: 8, 128>}]} {
    %c0 = arith.constant 0 : index
    %c0_0 = arith.constant 0 : index
    %c0_1 = arith.constant 0 : index
    %0 = vector.load %arg2[%c0, %c0_0, %c0_1] : memref<8x8x128xf32, #tpu.memory_space<vmem>>, vector<8x8x128xf32>
    %cst = arith.constant dense<0.000000e+00> : vector<8x128xf32>
    %1 = vector.multi_reduction <add>, %0, %cst [1] : vector<8x8x128xf32> to vector<8x128xf32>
    %2 = vector.shape_cast %1 : vector<8x128xf32> to vector<8x1x128xf32>
    %cst_2 = arith.constant 1.250000e-01 : f32
    %3 = vector.broadcast %cst_2 : f32 to vector<8x1x128xf32>
    %4 = arith.mulf %2, %3 : vector<8x1x128xf32>
    %5 = arith.mulf %0, %0 : vector<8x8x128xf32>
    %cst_3 = arith.constant dense<0.000000e+00> : vector<8x128xf32>
    %6 = vector.multi_reduction <add>, %5, %cst_3 [1] : vector<8x8x128xf32> to vector<8x128xf32>
    %7 = vector.shape_cast %6 : vector<8x128xf32> to vector<8x1x128xf32>
    %cst_4 = arith.constant 1.250000e-01 : f32
    %8 = vector.broadcast %cst_4 : f32 to vector<8x1x128xf32>
    %9 = arith.mulf %7, %8 : vector<8x1x128xf32>
    %10 = arith.mulf %4, %4 : vector<8x1x128xf32>
    %11 = arith.subf %9, %10 : vector<8x1x128xf32>
    %cst_5 = arith.constant 0.000000e+00 : f32
    %12 = vector.broadcast %cst_5 : f32 to vector<8x1x128xf32>
    %13 = arith.maximumf %11, %12 : vector<8x1x128xf32>
    %cst_6 = arith.constant 9.99999974E-6 : f32
    %14 = vector.broadcast %cst_6 : f32 to vector<8x1x128xf32>
    %15 = arith.addf %13, %14 : vector<8x1x128xf32>
    %16 = math.rsqrt %15 : vector<8x1x128xf32>
    %c0_7 = arith.constant 0 : index
    %c0_8 = arith.constant 0 : index
    %17 = vector.load %arg3[%c0_7, %c0_8] : memref<1x128xf32, #tpu.memory_space<vmem>>, vector<1x128xf32>
    %18 = vector.shape_cast %17 : vector<1x128xf32> to vector<1x1x128xf32>
    %c0_9 = arith.constant 0 : index
    %c0_10 = arith.constant 0 : index
    %19 = vector.load %arg4[%c0_9, %c0_10] : memref<1x128xf32, #tpu.memory_space<vmem>>, vector<1x128xf32>
    %20 = vector.shape_cast %19 : vector<1x128xf32> to vector<1x1x128xf32>
    %21 = vector.broadcast %18 : vector<1x1x128xf32> to vector<8x1x128xf32>
    %22 = arith.mulf %16, %21 : vector<8x1x128xf32>
    %23 = arith.mulf %4, %22 : vector<8x1x128xf32>
    %24 = vector.broadcast %20 : vector<1x1x128xf32> to vector<8x1x128xf32>
    %25 = arith.subf %24, %23 : vector<8x1x128xf32>
    %26 = vector.broadcast %22 : vector<8x1x128xf32> to vector<8x8x128xf32>
    %27 = arith.mulf %0, %26 : vector<8x8x128xf32>
    %28 = vector.broadcast %25 : vector<8x1x128xf32> to vector<8x8x128xf32>
    %29 = arith.addf %27, %28 : vector<8x8x128xf32>
    %c0_11 = arith.constant 0 : index
    %c0_12 = arith.constant 0 : index
    %c0_13 = arith.constant 0 : index
    %30 = vector.load %arg5[%c0_11, %c0_12, %c0_13] : memref<8x8x128xf32, #tpu.memory_space<vmem>>, vector<8x8x128xf32>
    tpu.vector_store %arg5[%c0_11, %c0_12, %c0_13], %29 {strides = array<i32>} : memref<8x8x128xf32, #tpu.memory_space<vmem>>, vector<8x8x128xf32>,
    %31 = vector.shape_cast %4 : vector<8x1x128xf32> to vector<8x128xf32>
    %c0_14 = arith.constant 0 : index
    %c0_15 = arith.constant 0 : index
    %32 = vector.load %arg6[%c0_14, %c0_15] : memref<8x128xf32, #tpu.memory_space<vmem>>, vector<8x128xf32>
    tpu.vector_store %arg6[%c0_14, %c0_15], %31 {strides = array<i32>} : memref<8x128xf32, #tpu.memory_space<vmem>>, vector<8x128xf32>,
    %33 = vector.shape_cast %13 : vector<8x1x128xf32> to vector<8x128xf32>
    %c0_16 = arith.constant 0 : index
    %c0_17 = arith.constant 0 : index
    %34 = vector.load %arg7[%c0_16, %c0_17] : memref<8x128xf32, #tpu.memory_space<vmem>>, vector<8x128xf32>
    tpu.vector_store %arg7[%c0_16, %c0_17], %33 {strides = array<i32>} : memref<8x128xf32, #tpu.memory_space<vmem>>, vector<8x128xf32>,
    return
  }
  func.func @transform_0(%arg0: i32, %arg1: i32) -> (i32, i32, i32) {
    %c0_i32 = arith.constant 0 : i32
    %c0_i32_0 = arith.constant 0 : i32
    return %arg0, %c0_i32, %arg1 : i32, i32, i32
  }
  func.func @transform_1(%arg0: i32, %arg1: i32) -> (i32, i32) {
    %c0_i32 = arith.constant 0 : i32
    %c0_i32_0 = arith.constant 0 : i32
    return %c0_i32, %arg1 : i32, i32
  }
  func.func @transform_2(%arg0: i32, %arg1: i32) -> (i32, i32) {
    %c0_i32 = arith.constant 0 : i32
    %c0_i32_0 = arith.constant 0 : i32
    return %c0_i32, %arg1 : i32, i32
  }
  func.func @transform_3(%arg0: i32, %arg1: i32) -> (i32, i32, i32) {
    %c0_i32 = arith.constant 0 : i32
    %c0_i32_0 = arith.constant 0 : i32
    return %arg0, %c0_i32, %arg1 : i32, i32, i32
  }
  func.func @transform_4(%arg0: i32, %arg1: i32) -> (i32, i32) {
    %c0_i32 = arith.constant 0 : i32
    return %arg0, %arg1 : i32, i32
  }
  func.func @transform_5(%arg0: i32, %arg1: i32) -> (i32, i32) {
    %c0_i32 = arith.constant 0 : i32
    return %arg0, %arg1 : i32, i32
  }
}

</mosaic_0001>

<llo_original>
// kernel: tpu_custom_call.1
$region0: #{tpu_custom_call.1}
  #allocation0 [shape = 'u32[]', space=smem, size = 0x4, offset = 0x4, fixed_abs, tag = 'smem constant byte address 0x4 - core index']
  #allocation1 [shape = 'u32[144,128]{1,0:T(1,128)}', space=vmem, size = 0x12000, scoped, tag = 'internal scratch']
  %s0 = inlined_call_operand.hbm [shape: f32[32,8,128], index: 0, kind: input, shape index: {}]
  %s1 = inlined_call_operand.vmem [shape: f32[1,128], index: 1, kind: input, shape index: {}]
  %s2 = inlined_call_operand.vmem [shape: f32[1,128], index: 2, kind: input, shape index: {}]
  %s3 = inlined_call_operand.hbm [shape: f32[32,8,128], index: 3, kind: output, shape index: {0}]
  %s4 = inlined_call_operand.hbm [shape: f32[32,128], index: 4, kind: output, shape index: {1}]
  %s5 = inlined_call_operand.hbm [shape: f32[32,128], index: 5, kind: output, shape index: {2}]
  %6 = xla_tuple %s3, %s4, %s5
  %s7 = sld [smem:[#allocation0]]
  $region65: #{tpu_custom_call.1} parent=0
    _
  %s9 = ssub.s32 1, %s7
  %s10 = scalar_select 0, %s9, %s7
  $region1: #{tpu_custom_call.1} parent=0
    #allocation2 [shape = 'u8[65536]{0}', space=vmem, size = 0x10000, scoped, tag = 'input window, operand 0']
    #allocation3 [shape = 's32[2]{0}', space=sflag, size = 0x8, scoped, tag = 'scoped memory for tpu_custom_call.1']
    #allocation4 [shape = 's32[2]{0}', space=sflag, size = 0x8, scoped, tag = 'scoped memory for tpu_custom_call.1']
    #allocation5 [shape = 'u8[65536]{0}', space=vmem, size = 0x10000, scoped, tag = 'output window, operand 0']
    #allocation6 [shape = 'u8[8192]{0}', space=vmem, size = 0x2000, scoped, tag = 'output window, operand 1']
    #allocation7 [shape = 's32[2]{0}', space=sflag, size = 0x8, scoped, tag = 'scoped memory for tpu_custom_call.1']
    #allocation8 [shape = 'u8[8192]{0}', space=vmem, size = 0x2000, scoped, tag = 'output window, operand 2']
    %11 = vsyncpa [#allocation3], 0
    %s12 = scalar_lea.sflag [#allocation3], 1
    %13 = vsyncpa %s12, 0
    %14 = vsyncpa [#allocation4], 0
    %s15 = scalar_lea.sflag [#allocation4], 1
    %16 = vsyncpa %s15, 0
    %17 = vsyncpa [#allocation7], 0
    %s18 = scalar_lea.sflag [#allocation7], 1
    %19 = vsyncpa %s18, 0
    loop: start=0, step=1, limit=6
    $region2: #{tpu_custom_call.1} parent=1 // loop_pre_header
      _
    $region3: #{tpu_custom_call.1} parent=1 // loop_header
      %s21 = sphi 0, %s25
      %p22 = scmp.ge.s32.totalorder %s21, 6
      %s28 = sphi 0, %s40
      %s29 = sphi 0, %s36
      %s30 = sphi 0, %s28
      %s31 = sphi 0, %s29
      %s32 = sphi 0, %s30
      %s33 = sphi 0, %s31
      %s45 = sphi 0, %s47
      %s48 = sphi 0, %s45
      %s49 = sphi 0, %s48
      %s65 = sphi 0, %s49
      %s71 = sphi 0, %s73
      %s74 = sphi 0, %s71
      %s75 = sphi 0, %s74
      %s91 = sphi 0, %s75
      %s97 = sphi 0, %s99
      %s100 = sphi 0, %s97
      %s101 = sphi 0, %s100
      %s117 = sphi 0, %s101
      %s125 = sphi 0, %s127
      %s128 = sphi 0, %s125
      %s129 = sphi 0, %s128
      %s145 = sphi 0, %s129
      %s153 = sphi 0, %s155
      %s156 = sphi 0, %s153
      %s157 = sphi 0, %s156
      %s173 = sphi 0, %s157
      %s181 = sphi 0, %s183
      %s184 = sphi 0, %s181
      %s185 = sphi 0, %s184
      %s201 = sphi 0, %s185
    $region4: #{tpu_custom_call.1} parent=1 // loop_header_branch
      %24 = sbr.rel (%p22) target = $region8
    $region5: #{tpu_custom_call.1} parent=1 // loop_body
      %s26 = ssub.s32 %s21, 1
      %s27 = ssub.s32 %s21, 2
      %s34 = sadd.s32 1, %s29
      %p35 = scmp.ge.s32.totalorder %s34, 1
      %s36 = scalar_select %p35, 0, %s34
      %s37 = sadd.s32 1, %s28
      %s38 = scalar_select %p35, %s37, %s28
      %p39 = scmp.ge.s32.totalorder %s38, 4
      %s40 = scalar_select %p39, 0, %s38
      %s41 = ssub.s32 %s28, %s40
      %s42 = ssub.s32 %s29, %s36
      %s43 = sor.u32 %s41, %s42
      %p44 = scmp.eq.s32.totalorder %s43, 0
      %s46 = sadd.s32 %s45, 1
      %s47 = scalar_select %p44, %s45, %s46
      %p50 = pneg %p44
      %p51 = scmp.eq.s32.totalorder %s21, 3
      %p52 = por %p50, %p51
      %p53 = scmp.ne.s32.totalorder %s45, %s48
      %p54 = scmp.eq.s32.totalorder %s21, 0
      %p55 = por %p53, %p54
      %p56 = scmp.ne.s32.totalorder %s45, %s48
      %p57 = scmp.eq.s32.totalorder %s26, 3
      %p58 = por %p56, %p57
      %p59 = scmp.ne.s32.totalorder %s48, %s49
      %p60 = scmp.eq.s32.totalorder %s26, 0
      %p61 = por %p59, %p60
      %p62 = scmp.ne.s32.totalorder %s48, %s49
      %p63 = scmp.eq.s32.totalorder %s27, 3
      %p64 = por %p62, %p63
      %p66 = scmp.ne.s32.totalorder %s49, %s65
      %p67 = scmp.eq.s32.totalorder %s27, 0
      %p68 = por %p66, %p67
      %s69 = ssub.s32 %s29, %s36
      %p70 = scmp.eq.s32.totalorder %s69, 0
      %s72 = sadd.s32 %s71, 1
      %s73 = scalar_select %p70, %s71, %s72
      %p76 = pneg %p70
      %p77 = scmp.eq.s32.totalorder %s21, 3
      %p78 = por %p76, %p77
      %p79 = scmp.ne.s32.totalorder %s71, %s74
      %p80 = scmp.eq.s32.totalorder %s21, 0
      %p81 = por %p79, %p80
      %p82 = scmp.ne.s32.totalorder %s71, %s74
      %p83 = scmp.eq.s32.totalorder %s26, 3
      %p84 = por %p82, %p83
      %p85 = scmp.ne.s32.totalorder %s74, %s75
      %p86 = scmp.eq.s32.totalorder %s26, 0
      %p87 = por %p85, %p86
      %p88 = scmp.ne.s32.totalorder %s74, %s75
      %p89 = scmp.eq.s32.totalorder %s27, 3
      %p90 = por %p88, %p89
      %p92 = scmp.ne.s32.totalorder %s75, %s91
      %p93 = scmp.eq.s32.totalorder %s27, 0
      %p94 = por %p92, %p93
      %s95 = ssub.s32 %s29, %s36
      %p96 = scmp.eq.s32.totalorder %s95, 0
      %s98 = sadd.s32 %s97, 1
      %s99 = scalar_select %p96, %s97, %s98
      %p102 = pneg %p96
      %p103 = scmp.eq.s32.totalorder %s21, 3
      %p104 = por %p102, %p103
      %p105 = scmp.ne.s32.totalorder %s97, %s100
      %p106 = scmp.eq.s32.totalorder %s21, 0
      %p107 = por %p105, %p106
      %p108 = scmp.ne.s32.totalorder %s97, %s100
      %p109 = scmp.eq.s32.totalorder %s26, 3
      %p110 = por %p108, %p109
      %p111 = scmp.ne.s32.totalorder %s100, %s101
      %p112 = scmp.eq.s32.totalorder %s26, 0
      %p113 = por %p111, %p112
      %p114 = scmp.ne.s32.totalorder %s100, %s101
      %p115 = scmp.eq.s32.totalorder %s27, 3
      %p116 = por %p114, %p115
      %p118 = scmp.ne.s32.totalorder %s101, %s117
      %p119 = scmp.eq.s32.totalorder %s27, 0
      %p120 = por %p118, %p119
      %s121 = ssub.s32 %s28, %s40
      %s122 = ssub.s32 %s29, %s36
      %s123 = sor.u32 %s121, %s122
      %p124 = scmp.eq.s32.totalorder %s123, 0
      %s126 = sadd.s32 %s125, 1
      %s127 = scalar_select %p124, %s125, %s126
      %p130 = pneg %p124
      %p131 = scmp.eq.s32.totalorder %s21, 3
      %p132 = por %p130, %p131
      %p133 = scmp.ne.s32.totalorder %s125, %s128
      %p134 = scmp.eq.s32.totalorder %s21, 0
      %p135 = por %p133, %p134
      %p136 = scmp.ne.s32.totalorder %s125, %s128
      %p137 = scmp.eq.s32.totalorder %s26, 3
      %p138 = por %p136, %p137
      %p139 = scmp.ne.s32.totalorder %s128, %s129
      %p140 = scmp.eq.s32.totalorder %s26, 0
      %p141 = por %p139, %p140
      %p142 = scmp.ne.s32.totalorder %s128, %s129
      %p143 = scmp.eq.s32.totalorder %s27, 3
      %p144 = por %p142, %p143
      %p146 = scmp.ne.s32.totalorder %s129, %s145
      %p147 = scmp.eq.s32.totalorder %s27, 0
      %p148 = por %p146, %p147
      %s149 = ssub.s32 %s28, %s40
      %s150 = ssub.s32 %s29, %s36
      %s151 = sor.u32 %s149, %s150
      %p152 = scmp.eq.s32.totalorder %s151, 0
      %s154 = sadd.s32 %s153, 1
      %s155 = scalar_select %p152, %s153, %s154
      %p158 = pneg %p152
      %p159 = scmp.eq.s32.totalorder %s21, 3
      %p160 = por %p158, %p159
      %p161 = scmp.ne.s32.totalorder %s153, %s156
      %p162 = scmp.eq.s32.totalorder %s21, 0
      %p163 = por %p161, %p162
      %p164 = scmp.ne.s32.totalorder %s153, %s156
      %p165 = scmp.eq.s32.totalorder %s26, 3
      %p166 = por %p164, %p165
      %p167 = scmp.ne.s32.totalorder %s156, %s157
      %p168 = scmp.eq.s32.totalorder %s26, 0
      %p169 = por %p167, %p168
      %p170 = scmp.ne.s32.totalorder %s156, %s157
      %p171 = scmp.eq.s32.totalorder %s27, 3
      %p172 = por %p170, %p171
      %p174 = scmp.ne.s32.totalorder %s157, %s173
      %p175 = scmp.eq.s32.totalorder %s27, 0
      %p176 = por %p174, %p175
      %s177 = ssub.s32 %s28, %s40
      %s178 = ssub.s32 %s29, %s36
      %s179 = sor.u32 %s177, %s178
      %p180 = scmp.eq.s32.totalorder %s179, 0
      %s182 = sadd.s32 %s181, 1
      %s183 = scalar_select %p180, %s181, %s182
      %p186 = pneg %p180
      %p187 = scmp.eq.s32.totalorder %s21, 3
      %p188 = por %p186, %p187
      %p189 = scmp.ne.s32.totalorder %s181, %s184
      %p190 = scmp.eq.s32.totalorder %s21, 0
      %p191 = por %p189, %p190
      %p192 = scmp.ne.s32.totalorder %s181, %s184
      %p193 = scmp.eq.s32.totalorder %s26, 3
      %p194 = por %p192, %p193
      %p195 = scmp.ne.s32.totalorder %s184, %s185
      %p196 = scmp.eq.s32.totalorder %s26, 0
      %p197 = por %p195, %p196
      %p198 = scmp.ne.s32.totalorder %s184, %s185
      %p199 = scmp.eq.s32.totalorder %s27, 3
      %p200 = por %p198, %p199
      %p202 = scmp.ne.s32.totalorder %s185, %s201
      %p203 = scmp.eq.s32.totalorder %s27, 0
      %p204 = por %p202, %p203
      %p205 = scmp.le.s32.totalorder 1, %s21
      %p206 = scmp.lt.s32.totalorder %s21, 5
      %p207 = pnand %p205, %p206
      %p208 = pneg %p207
      // Predicated region
      $region9: #{tpu_custom_call.1} parent=5 // pred_check
        _
      $region10: #{tpu_custom_call.1} parent=5 // pred_check_branch
        %210 = sbr.rel (%p207) target = $region12
      $region11: #{tpu_custom_call.1} parent=5 // pred_region
        %s211 = ssub.s32 %s21, 1
        // Predicated region
        $region13: #{tpu_custom_call.1} parent=11 // pred_check
          %p212 = pneg %p87
        $region14: #{tpu_custom_call.1} parent=11 // pred_check_branch
          %214 = sbr.rel (%p212) target = $region16
        $region15: #{tpu_custom_call.1} parent=11 // pred_region
          %p215 = scmp.lt.s32.totalorder %s31, 0
          %s216 = scalar_select %p215, %s31, 0
          %s217 = scalar_lea.vmem %s1, %s216
        $region16: #{tpu_custom_call.1} parent=11 // pred_fallthru
          _
        // Predicated region
        $region17: #{tpu_custom_call.1} parent=11 // pred_check
          %p218 = pneg %p113
        $region18: #{tpu_custom_call.1} parent=11 // pred_check_branch
          %220 = sbr.rel (%p218) target = $region20
        $region19: #{tpu_custom_call.1} parent=11 // pred_region
          %p221 = scmp.lt.s32.totalorder %s31, 0
          %s222 = scalar_select %p221, %s31, 0
          %s223 = scalar_lea.vmem %s2, %s222
        $region20: #{tpu_custom_call.1} parent=11 // pred_fallthru
          _
      $region12: #{tpu_custom_call.1} parent=5 // pred_fallthru
        _
      %p224 = scmp.lt.s32.totalorder %s21, 4
      // Predicated region
      $region21: #{tpu_custom_call.1} parent=5 // pred_check
        %p225 = pneg %p224
      $region22: #{tpu_custom_call.1} parent=5 // pred_check_branch
        %227 = sbr.rel (%p225) target = $region24
      $region23: #{tpu_custom_call.1} parent=5 // pred_region
        // Predicated region
        $region25: #{tpu_custom_call.1} parent=23 // pred_check
          %p228 = pneg %p55
        $region26: #{tpu_custom_call.1} parent=23 // pred_check_branch
          %230 = sbr.rel (%p228) target = $region28
        $region27: #{tpu_custom_call.1} parent=23 // pred_region
          %s231 = sand.u32 %s45, 1
          %s232 = scalar_lea.sflag [#allocation3], %s231
          %s233 = sand.u32 %s45, 1
          %s234 = smul.addr %s233, 64
          %s235 = scalar_lea.vmem [#allocation2], %s234
          %s236 = smul.u32 8, %s28
          %s238 = ssub.s32 1024, 1024
          %239 = vsyncadd %s232, %s238
          %s240 = sadd.s32 %s29, %s236
          %s241 = smul.addr %s240, 128
          %s242 = scalar_lea.hbm %s0, %s241
          %s243 = sshll.u32 %s235, 4
          %s244 = int_to_ptr.vmem [resolvable:$true] %s243
          %249 = dma.hbm_to_vmem [thread:$0]  %s242, 1024, %s244, %s232, 128, 128, 8
        $region28: #{tpu_custom_call.1} parent=23 // pred_fallthru
          _
      $region24: #{tpu_custom_call.1} parent=5 // pred_fallthru
        _
      %p250 = scmp.le.s32.totalorder 1, %s21
      %p251 = scmp.lt.s32.totalorder %s21, 5
      %p252 = pnand %p250, %p251
      %p253 = pneg %p252
      // Predicated region
      $region29: #{tpu_custom_call.1} parent=5 // pred_check
        _
      $region30: #{tpu_custom_call.1} parent=5 // pred_check_branch
        %255 = sbr.rel (%p252) target = $region32
      $region31: #{tpu_custom_call.1} parent=5 // pred_region
        %s256 = ssub.s32 %s21, 1
        %s257 = sand.u32 %s48, 1
        %s258 = scalar_lea.sflag [#allocation3], %s257
        %s259 = sand.u32 %s48, 1
        %s260 = smul.addr %s259, 64
        %s261 = scalar_lea.vmem [#allocation2], %s260
        // Predicated region
        $region33: #{tpu_custom_call.1} parent=31 // pred_check
          %p262 = pneg %p61
        $region34: #{tpu_custom_call.1} parent=31 // pred_check_branch
          %264 = sbr.rel (%p262) target = $region36
        $region35: #{tpu_custom_call.1} parent=31 // pred_region
          %265 = dma.done %s258, 1024
        $region36: #{tpu_custom_call.1} parent=31 // pred_fallthru
          _
        %s266 = sand.u32 %s48, 1
        %s267 = scalar_lea.sflag [#allocation3], %s266
        %s268 = sand.u32 %s48, 1
        %s269 = smul.addr %s268, 64
        %s270 = scalar_lea.vmem [#allocation2], %s269
        %p271 = pneg %p61
        %p272 = pneg %p58
        %p273 = scmp.lt.s32.totalorder %s31, 0
        %s274 = scalar_select %p273, %s31, 0
        %s275 = scalar_lea.vmem %s1, %s274
        %p276 = pneg %p87
        %p277 = pneg %p84
        %p278 = scmp.lt.s32.totalorder %s31, 0
        %s279 = scalar_select %p278, %s31, 0
        %s280 = scalar_lea.vmem %s2, %s279
        %p281 = pneg %p113
        %p282 = pneg %p110
        %p283 = pneg %p141
        %p284 = pneg %p138
        %s285 = sand.u32 %s128, 1
        %s286 = scalar_lea.sflag [#allocation4], %s285
        %s287 = sand.u32 %s128, 1
        %s288 = smul.addr %s287, 64
        %s289 = scalar_lea.vmem [#allocation5], %s288
        %p290 = pneg %p169
        %p291 = pneg %p166
        %s292 = sand.u32 %s26, 1
        %s293 = scalar_lea.sflag [#allocation7], %s292
        %s294 = sand.u32 %s156, 1
        %s295 = smul.addr %s294, 8
        %s296 = scalar_lea.vmem [#allocation6], %s295
        %p297 = pneg %p197
        %p298 = pneg %p194
        %s299 = sand.u32 %s26, 1
        %s300 = scalar_lea.sflag [#allocation7], %s299
        %s301 = sand.u32 %s184, 1
        %s302 = smul.addr %s301, 8
        %s303 = scalar_lea.vmem [#allocation8], %s302
        %s304 = smul.u32 8, %s30
        %p305 = scmp.lt.s32.totalorder %s31, 0
        %s306 = scalar_select %p305, %s31, 0
        %s307 = scalar_lea.vmem %s1, %s306
        %p308 = scmp.lt.s32.totalorder %s31, 0
        %s309 = scalar_select %p308, %s31, 0
        %s310 = scalar_lea.vmem %s2, %s309
        %s311 = smul.u32 8, %s30
        %v312 = vld [vmem:[%s261] sm:$0xff]
        %v313 = vld [vmem:[%s261 + $0x8] sm:$0xff]
        %v314 = vld [vmem:[%s261 + $0x10] sm:$0xff]
        %v315 = vld [vmem:[%s261 + $0x18] sm:$0xff]
        %v316 = vld [vmem:[%s261 + $0x20] sm:$0xff]
        %v317 = vld [vmem:[%s261 + $0x28] sm:$0xff]
        %v318 = vld [vmem:[%s261 + $0x30] sm:$0xff]
        %v319 = vld [vmem:[%s261 + $0x38] sm:$0xff]
        %v320 = vrot.slane %v312, 4
        %v321 = vadd.f32 %v312, %v320
        %v322 = vrot.slane %v321, 2
        %v323 = vadd.f32 %v321, %v322
        %v324 = vrot.slane %v323, 1
        %v325 = vadd.f32 %v323, %v324
        %v326 = vrot.slane %v313, 4
        %v327 = vadd.f32 %v313, %v326
        %v328 = vrot.slane %v327, 2
        %v329 = vadd.f32 %v327, %v328
        %v330 = vrot.slane %v329, 1
        %v331 = vadd.f32 %v329, %v330
        %v332 = vrot.slane %v314, 4
        %v333 = vadd.f32 %v314, %v332
        %v334 = vrot.slane %v333, 2
        %v335 = vadd.f32 %v333, %v334
        %v336 = vrot.slane %v335, 1
        %v337 = vadd.f32 %v335, %v336
        %v338 = vrot.slane %v315, 4
        %v339 = vadd.f32 %v315, %v338
        %v340 = vrot.slane %v339, 2
        %v341 = vadd.f32 %v339, %v340
        %v342 = vrot.slane %v341, 1
        %v343 = vadd.f32 %v341, %v342
        %v344 = vrot.slane %v316, 4
        %v345 = vadd.f32 %v316, %v344
        %v346 = vrot.slane %v345, 2
        %v347 = vadd.f32 %v345, %v346
        %v348 = vrot.slane %v347, 1
        %v349 = vadd.f32 %v347, %v348
        %v350 = vrot.slane %v317, 4
        %v351 = vadd.f32 %v317, %v350
        %v352 = vrot.slane %v351, 2
        %v353 = vadd.f32 %v351, %v352
        %v354 = vrot.slane %v353, 1
        %v355 = vadd.f32 %v353, %v354
        %v356 = vrot.slane %v318, 4
        %v357 = vadd.f32 %v318, %v356
        %v358 = vrot.slane %v357, 2
        %v359 = vadd.f32 %v357, %v358
        %v360 = vrot.slane %v359, 1
        %v361 = vadd.f32 %v359, %v360
        %v362 = vrot.slane %v319, 4
        %v363 = vadd.f32 %v319, %v362
        %v364 = vrot.slane %v363, 2
        %v365 = vadd.f32 %v363, %v364
        %v366 = vrot.slane %v365, 1
        %v367 = vadd.f32 %v365, %v366
        %v368 = vmul.f32 %v325, 0.125
        %v369 = vmul.f32 %v331, 0.125
        %v370 = vmul.f32 %v337, 0.125
        %v371 = vmul.f32 %v343, 0.125
        %v372 = vmul.f32 %v349, 0.125
        %v373 = vmul.f32 %v355, 0.125
        %v374 = vmul.f32 %v361, 0.125
        %v375 = vmul.f32 %v367, 0.125
        %v376 = vmul.f32 %v312, %v312
        %v377 = vmul.f32 %v313, %v313
        %v378 = vmul.f32 %v314, %v314
        %v379 = vmul.f32 %v315, %v315
        %v380 = vmul.f32 %v316, %v316
        %v381 = vmul.f32 %v317, %v317
        %v382 = vmul.f32 %v318, %v318
        %v383 = vmul.f32 %v319, %v319
        %v384 = vrot.slane %v376, 4
        %v385 = vadd.f32 %v376, %v384
        %v386 = vrot.slane %v385, 2
        %v387 = vadd.f32 %v385, %v386
        %v388 = vrot.slane %v387, 1
        %v389 = vadd.f32 %v387, %v388
        %v390 = vrot.slane %v377, 4
        %v391 = vadd.f32 %v377, %v390
        %v392 = vrot.slane %v391, 2
        %v393 = vadd.f32 %v391, %v392
        %v394 = vrot.slane %v393, 1
        %v395 = vadd.f32 %v393, %v394
        %v396 = vrot.slane %v378, 4
        %v397 = vadd.f32 %v378, %v396
        %v398 = vrot.slane %v397, 2
        %v399 = vadd.f32 %v397, %v398
        %v400 = vrot.slane %v399, 1
        %v401 = vadd.f32 %v399, %v400
        %v402 = vrot.slane %v379, 4
        %v403 = vadd.f32 %v379, %v402
        %v404 = vrot.slane %v403, 2
        %v405 = vadd.f32 %v403, %v404
        %v406 = vrot.slane %v405, 1
        %v407 = vadd.f32 %v405, %v406
        %v408 = vrot.slane %v380, 4
        %v409 = vadd.f32 %v380, %v408
        %v410 = vrot.slane %v409, 2
        %v411 = vadd.f32 %v409, %v410
        %v412 = vrot.slane %v411, 1
        %v413 = vadd.f32 %v411, %v412
        %v414 = vrot.slane %v381, 4
        %v415 = vadd.f32 %v381, %v414
        %v416 = vrot.slane %v415, 2
        %v417 = vadd.f32 %v415, %v416
        %v418 = vrot.slane %v417, 1
        %v419 = vadd.f32 %v417, %v418
        %v420 = vrot.slane %v382, 4
        %v421 = vadd.f32 %v382, %v420
        %v422 = vrot.slane %v421, 2
        %v423 = vadd.f32 %v421, %v422
        %v424 = vrot.slane %v423, 1
        %v425 = vadd.f32 %v423, %v424
        %v426 = vrot.slane %v383, 4
        %v427 = vadd.f32 %v383, %v426
        %v428 = vrot.slane %v427, 2
        %v429 = vadd.f32 %v427, %v428
        %v430 = vrot.slane %v429, 1
        %v431 = vadd.f32 %v429, %v430
        %v432 = vmul.f32 %v389, 0.125
        %v433 = vmul.f32 %v395, 0.125
        %v434 = vmul.f32 %v401, 0.125
        %v435 = vmul.f32 %v407, 0.125
        %v436 = vmul.f32 %v413, 0.125
        %v437 = vmul.f32 %v419, 0.125
        %v438 = vmul.f32 %v425, 0.125
        %v439 = vmul.f32 %v431, 0.125
        %v440 = vmul.f32 %v368, %v368
        %v441 = vmul.f32 %v369, %v369
        %v442 = vmul.f32 %v370, %v370
        %v443 = vmul.f32 %v371, %v371
        %v444 = vmul.f32 %v372, %v372
        %v445 = vmul.f32 %v373, %v373
        %v446 = vmul.f32 %v374, %v374
        %v447 = vmul.f32 %v375, %v375
        %v448 = vsub.f32 %v432, %v440
        %v449 = vsub.f32 %v433, %v441
        %v450 = vsub.f32 %v434, %v442
        %v451 = vsub.f32 %v435, %v443
        %v452 = vsub.f32 %v436, %v444
        %v453 = vsub.f32 %v437, %v445
        %v454 = vsub.f32 %v438, %v446
        %v455 = vsub.f32 %v439, %v447
        %v456 = vmax.f32 %v448, 0.0
        %v457 = vmax.f32 %v449, 0.0
        %v458 = vmax.f32 %v450, 0.0
        %v459 = vmax.f32 %v451, 0.0
        %v460 = vmax.f32 %v452, 0.0
        %v461 = vmax.f32 %v453, 0.0
        %v462 = vmax.f32 %v454, 0.0
        %v463 = vmax.f32 %v455, 0.0
        %v464 = vadd.f32 %v456, 1e-05
        %v465 = vadd.f32 %v457, 1e-05
        %v466 = vadd.f32 %v458, 1e-05
        %v467 = vadd.f32 %v459, 1e-05
        %v468 = vadd.f32 %v460, 1e-05
        %v469 = vadd.f32 %v461, 1e-05
        %v470 = vadd.f32 %v462, 1e-05
        %v471 = vadd.f32 %v463, 1e-05
        %v472 = vrsqrt.pop %v464
        %v473 = vrsqrt.pop %v465
        %v474 = vrsqrt.pop %v466
        %v475 = vrsqrt.pop %v467
        %v476 = vrsqrt.pop %v468
        %v477 = vrsqrt.pop %v469
        %v478 = vrsqrt.pop %v470
        %v479 = vrsqrt.pop %v471
        %v480 = vld [vmem:[%s307] sm:$0x1]
        %v481 = vld [vmem:[%s310] sm:$0x1]
        %v482 = vmul.f32 %v472, %v480
        %v483 = vmul.f32 %v473, %v480
        %v484 = vmul.f32 %v474, %v480
        %v485 = vmul.f32 %v475, %v480
        %v486 = vmul.f32 %v476, %v480
        %v487 = vmul.f32 %v477, %v480
        %v488 = vmul.f32 %v478, %v480
        %v489 = vmul.f32 %v479, %v480
        %v490 = vmul.f32 %v368, %v482
        %v491 = vmul.f32 %v369, %v483
        %v492 = vmul.f32 %v370, %v484
        %v493 = vmul.f32 %v371, %v485
        %v494 = vmul.f32 %v372, %v486
        %v495 = vmul.f32 %v373, %v487
        %v496 = vmul.f32 %v374, %v488
        %v497 = vmul.f32 %v375, %v489
        %v498 = vsub.f32 %v481, %v490
        %v499 = vsub.f32 %v481, %v491
        %v500 = vsub.f32 %v481, %v492
        %v501 = vsub.f32 %v481, %v493
        %v502 = vsub.f32 %v481, %v494
        %v503 = vsub.f32 %v481, %v495
        %v504 = vsub.f32 %v481, %v496
        %v505 = vsub.f32 %v481, %v497
        %v506 = vlaneseq
        %v507 = vshrl.u32 %v506, 7
        %v508 = vsub.s32 0, %v507
        %v509 = vrot.slane %v482, %v508
        %v510 = vlaneseq
        %v511 = vshrl.u32 %v510, 7
        %v512 = vsub.s32 0, %v511
        %v513 = vrot.slane %v483, %v512
        %v514 = vlaneseq
        %v515 = vshrl.u32 %v514, 7
        %v516 = vsub.s32 0, %v515
        %v517 = vrot.slane %v484, %v516
        %v518 = vlaneseq
        %v519 = vshrl.u32 %v518, 7
        %v520 = vsub.s32 0, %v519
        %v521 = vrot.slane %v485, %v520
        %v522 = vlaneseq
        %v523 = vshrl.u32 %v522, 7
        %v524 = vsub.s32 0, %v523
        %v525 = vrot.slane %v486, %v524
        %v526 = vlaneseq
        %v527 = vshrl.u32 %v526, 7
        %v528 = vsub.s32 0, %v527
        %v529 = vrot.slane %v487, %v528
        %v530 = vlaneseq
        %v531 = vshrl.u32 %v530, 7
        %v532 = vsub.s32 0, %v531
        %v533 = vrot.slane %v488, %v532
        %v534 = vlaneseq
        %v535 = vshrl.u32 %v534, 7
        %v536 = vsub.s32 0, %v535
        %v537 = vrot.slane %v489, %v536
        %v538 = vmul.f32 %v312, %v509
        %v539 = vmul.f32 %v313, %v513
        %v540 = vmul.f32 %v314, %v517
        %v541 = vmul.f32 %v315, %v521
        %v542 = vmul.f32 %v316, %v525
        %v543 = vmul.f32 %v317, %v529
        %v544 = vmul.f32 %v318, %v533
        %v545 = vmul.f32 %v319, %v537
        %v554 = vlaneseq
        %v555 = vshrl.u32 %v554, 7
        %v556 = vsub.s32 0, %v555
        %v557 = vrot.slane %v498, %v556
        %v558 = vlaneseq
        %v559 = vshrl.u32 %v558, 7
        %v560 = vsub.s32 0, %v559
        %v561 = vrot.slane %v499, %v560
        %v562 = vlaneseq
        %v563 = vshrl.u32 %v562, 7
        %v564 = vsub.s32 0, %v563
        %v565 = vrot.slane %v500, %v564
        %v566 = vlaneseq
        %v567 = vshrl.u32 %v566, 7
        %v568 = vsub.s32 0, %v567
        %v569 = vrot.slane %v501, %v568
        %v570 = vlaneseq
        %v571 = vshrl.u32 %v570, 7
        %v572 = vsub.s32 0, %v571
        %v573 = vrot.slane %v502, %v572
        %v574 = vlaneseq
        %v575 = vshrl.u32 %v574, 7
        %v576 = vsub.s32 0, %v575
        %v577 = vrot.slane %v503, %v576
        %v578 = vlaneseq
        %v579 = vshrl.u32 %v578, 7
        %v580 = vsub.s32 0, %v579
        %v581 = vrot.slane %v504, %v580
        %v582 = vlaneseq
        %v583 = vshrl.u32 %v582, 7
        %v584 = vsub.s32 0, %v583
        %v585 = vrot.slane %v505, %v584
        %v594 = vadd.f32 %v538, %v557
        %v595 = vadd.f32 %v539, %v561
        %v596 = vadd.f32 %v540, %v565
        %v597 = vadd.f32 %v541, %v569
        %v598 = vadd.f32 %v542, %v573
        %v599 = vadd.f32 %v543, %v577
        %v600 = vadd.f32 %v544, %v581
        %v601 = vadd.f32 %v545, %v585
        %602 = vst [vmem:[%s289] sm:$0xff] %v594
        %603 = vst [vmem:[%s289 + $0x8] sm:$0xff] %v595
        %604 = vst [vmem:[%s289 + $0x10] sm:$0xff] %v596
        %605 = vst [vmem:[%s289 + $0x18] sm:$0xff] %v597
        %606 = vst [vmem:[%s289 + $0x20] sm:$0xff] %v598
        %607 = vst [vmem:[%s289 + $0x28] sm:$0xff] %v599
        %608 = vst [vmem:[%s289 + $0x30] sm:$0xff] %v600
        %609 = vst [vmem:[%s289 + $0x38] sm:$0xff] %v601
        %vm618 = vcmask 1041409
        %v619 = vsel %vm618, %v369, %v368
        %vm620 = vcmask 1042434
        %v621 = vsel %vm620, %v370, %v619
        %vm622 = vcmask 1043459
        %v623 = vsel %vm622, %v371, %v621
        %vm624 = vcmask 1044484
        %v625 = vsel %vm624, %v372, %v623
        %vm626 = vcmask 1045509
        %v627 = vsel %vm626, %v373, %v625
        %vm628 = vcmask 1046534
        %v629 = vsel %vm628, %v374, %v627
        %vm630 = vcmask 1047559
        %v631 = vsel %vm630, %v375, %v629
        %633 = vst [vmem:[%s296] sm:$0xff] %v631
        %v642 = vsel %vm618, %v457, %v456
        %v643 = vsel %vm620, %v458, %v642
        %v644 = vsel %vm622, %v459, %v643
        %v645 = vsel %vm624, %v460, %v644
        %v646 = vsel %vm626, %v461, %v645
        %v647 = vsel %vm628, %v462, %v646
        %v648 = vsel %vm630, %v463, %v647
        %650 = vst [vmem:[%s303] sm:$0xff] %v648
        %s651 = sand.u32 %s128, 1
        %s652 = scalar_lea.sflag [#allocation4], %s651
        %s653 = sand.u32 %s128, 1
        %s654 = smul.addr %s653, 64
        %s655 = scalar_lea.vmem [#allocation5], %s654
        %s656 = sand.u32 %s26, 1
        %s657 = scalar_lea.sflag [#allocation7], %s656
        %s658 = sand.u32 %s156, 1
        %s659 = smul.addr %s658, 8
        %s660 = scalar_lea.vmem [#allocation6], %s659
        %s661 = sand.u32 %s26, 1
        %s662 = scalar_lea.sflag [#allocation7], %s661
        %s663 = sand.u32 %s184, 1
        %s664 = smul.addr %s663, 8
        %s665 = scalar_lea.vmem [#allocation8], %s664
        // Predicated region
        $region37: #{tpu_custom_call.1} parent=31 // pred_check
          %p666 = pneg %p138
        $region38: #{tpu_custom_call.1} parent=31 // pred_check_branch
          %668 = sbr.rel (%p666) target = $region40
        $region39: #{tpu_custom_call.1} parent=31 // pred_region
          %s669 = smul.u32 8, %s30
          %s671 = ssub.s32 1024, 1024
          %672 = vsyncadd %s652, %s671
          %s673 = sadd.s32 %s31, %s669
          %s674 = smul.addr %s673, 128
          %s675 = scalar_lea.hbm %s3, %s674
          %s676 = sshll.u32 %s655, 4
          %s677 = int_to_ptr.vmem [resolvable:$true] %s676
          %682 = dma.vmem_to_hbm [thread:$0]  %s677, 1024, %s675, %s652, 128, 128, 8
        $region40: #{tpu_custom_call.1} parent=31 // pred_fallthru
          _
        // Predicated region
        $region41: #{tpu_custom_call.1} parent=31 // pred_check
          %p683 = pneg %p166
        $region42: #{tpu_custom_call.1} parent=31 // pred_check_branch
          %685 = sbr.rel (%p683) target = $region44
        $region43: #{tpu_custom_call.1} parent=31 // pred_region
          %s687 = ssub.s32 128, 128
          %688 = vsyncadd %s657, %s687
          %s689 = sadd.s32 %s31, %s30
          %s690 = smul.addr %s689, 128
          %s691 = scalar_lea.hbm %s4, %s690
          %s693 = sshll.u32 %s660, 4
          %s694 = int_to_ptr.vmem [resolvable:$true] %s693
          %696 = dma.vmem_to_hbm [thread:$0]  %s694, 128, %s691, %s657
        $region44: #{tpu_custom_call.1} parent=31 // pred_fallthru
          _
        // Predicated region
        $region45: #{tpu_custom_call.1} parent=31 // pred_check
          %p697 = pneg %p194
        $region46: #{tpu_custom_call.1} parent=31 // pred_check_branch
          %699 = sbr.rel (%p697) target = $region48
        $region47: #{tpu_custom_call.1} parent=31 // pred_region
          %s701 = ssub.s32 128, 128
          %702 = vsyncadd %s662, %s701
          %s703 = sadd.s32 %s31, %s30
          %s704 = smul.addr %s703, 128
          %s705 = scalar_lea.hbm %s5, %s704
          %s707 = sshll.u32 %s665, 4
          %s708 = int_to_ptr.vmem [resolvable:$true] %s707
          %710 = dma.vmem_to_hbm [thread:$0]  %s708, 128, %s705, %s662
        $region48: #{tpu_custom_call.1} parent=31 // pred_fallthru
          _
      $region32: #{tpu_custom_call.1} parent=5 // pred_fallthru
        _
      %p711 = scmp.le.s32.totalorder 2, %s21
      // Predicated region
      $region49: #{tpu_custom_call.1} parent=5 // pred_check
        %p712 = pneg %p711
      $region50: #{tpu_custom_call.1} parent=5 // pred_check_branch
        %714 = sbr.rel (%p712) target = $region52
      $region51: #{tpu_custom_call.1} parent=5 // pred_region
        %s715 = ssub.s32 %s21, 2
        // Predicated region
        $region53: #{tpu_custom_call.1} parent=51 // pred_check
          %p716 = pneg %p144
        $region54: #{tpu_custom_call.1} parent=51 // pred_check_branch
          %718 = sbr.rel (%p716) target = $region56
        $region55: #{tpu_custom_call.1} parent=51 // pred_region
          %s719 = sand.u32 %s129, 1
          %s720 = scalar_lea.sflag [#allocation4], %s719
          %s721 = sand.u32 %s129, 1
          %s722 = smul.addr %s721, 64
          %s723 = scalar_lea.vmem [#allocation5], %s722
          %724 = dma.done %s720, 1024
        $region56: #{tpu_custom_call.1} parent=51 // pred_fallthru
          _
        // Predicated region
        $region57: #{tpu_custom_call.1} parent=51 // pred_check
          %p725 = pneg %p172
        $region58: #{tpu_custom_call.1} parent=51 // pred_check_branch
          %727 = sbr.rel (%p725) target = $region60
        $region59: #{tpu_custom_call.1} parent=51 // pred_region
          %s728 = sand.u32 %s27, 1
          %s729 = scalar_lea.sflag [#allocation7], %s728
          %s730 = sand.u32 %s157, 1
          %s731 = smul.addr %s730, 8
          %s732 = scalar_lea.vmem [#allocation6], %s731
          %733 = dma.done %s729, 128
        $region60: #{tpu_custom_call.1} parent=51 // pred_fallthru
          _
        // Predicated region
        $region61: #{tpu_custom_call.1} parent=51 // pred_check
          %p734 = pneg %p200
        $region62: #{tpu_custom_call.1} parent=51 // pred_check_branch
          %736 = sbr.rel (%p734) target = $region64
        $region63: #{tpu_custom_call.1} parent=51 // pred_region
          %s737 = sand.u32 %s27, 1
          %s738 = scalar_lea.sflag [#allocation7], %s737
          %s739 = sand.u32 %s185, 1
          %s740 = smul.addr %s739, 8
          %s741 = scalar_lea.vmem [#allocation8], %s740
          %742 = dma.done %s738, 128
        $region64: #{tpu_custom_call.1} parent=51 // pred_fallthru
          _
      $region52: #{tpu_custom_call.1} parent=5 // pred_fallthru
        _
    $region6: #{tpu_custom_call.1} parent=1 // loop_footer
      %s25 = sadd.s32 1, %s21
    $region7: #{tpu_custom_call.1} parent=1 // loop_footer_branch
      %20 = sbr.rel target = $region3
    $region8: #{tpu_custom_call.1} parent=1 // loop_exit
      _
    %743 = vsyncpa [#allocation3], 1
    %s744 = scalar_lea.sflag [#allocation3], 1
    %745 = vsyncpa %s744, 1
    %746 = vsyncpa [#allocation4], 1
    %s747 = scalar_lea.sflag [#allocation4], 1
    %748 = vsyncpa %s747, 1
    %749 = vsyncpa [#allocation7], 1
    %s750 = scalar_lea.sflag [#allocation7], 1
    %751 = vsyncpa %s750, 1

</llo_original>
